<compile_context>
chip_gen: v5e
topology: v5e:2x2
jax: 0.10.0
libtpu: 0.0.40
codegen_flags: <defaults>
</compile_context>

<pallas_src>
import jax
import jax.numpy as jnp
from jax.experimental import pallas as pl
from jax.experimental.pallas import tpu as pltpu

NUM_GATE_TYPES = 11
GATE_PAD = 16            # one-hot width padded to a multiple of 8
EMBED_DIM = 16
HIDDEN_DIM = 32

# packed-parameter row layout (8-aligned row slots, 32 lanes wide)
_EW1_ROWS = (0, 16)      # emb @ W1 : rows 0..10 used, rest zero
_B1_ROW = 16
_W2_ROWS = (24, 56)
_B2_ROW = 56
_WO_ROWS = (64, 96)      # lane 0 = wo_lhs, lane 1 = wo_rhs, rest zero
_BO_ROW = 96
_PAR_ROWS = 104


# ----------------------------- Pallas kernel ------------------------------ #
def _gnn_kernel(idx_ref, adj_l_ref, adj_r_ref, pool_ref, par_ref,
                out_ref, stk_ref):
    nl = adj_l_ref.shape[0]          # padded LHS node count (static)
    n_tot = idx_ref.shape[0]         # padded LHS + RHS node count (static)

    ew1 = par_ref[_EW1_ROWS[0]:_EW1_ROWS[1], :]      # (16, 32)
    b1 = par_ref[_B1_ROW:_B1_ROW + 1, :]             # (1, 32)
    w2 = par_ref[_W2_ROWS[0]:_W2_ROWS[1], :]         # (32, 32)
    b2 = par_ref[_B2_ROW:_B2_ROW + 1, :]             # (1, 32)
    wo = par_ref[_WO_ROWS[0]:_WO_ROWS[1], :]         # (32, 32), cols 0/1 used
    bo = par_ref[_BO_ROW:_BO_ROW + 1, 0:1]           # (1, 1)

    # fused embedding + layer-1 feature transform: one_hot @ (emb @ W1)
    iota = jax.lax.broadcasted_iota(jnp.int32, (n_tot, GATE_PAD), 1)
    one_hot = (idx_ref[...] == iota).astype(jnp.float32)
    x0 = jnp.dot(one_hot, ew1, preferred_element_type=jnp.float32)   # (n_tot, 32)

    def aggregate(h):
        # per-side GCN aggregation, staged into the stacked scratch buffer
        stk_ref[0:nl, :] = jnp.dot(adj_l_ref[...], h[0:nl, :],
                                   preferred_element_type=jnp.float32)
        stk_ref[nl:n_tot, :] = jnp.dot(adj_r_ref[...], h[nl:n_tot, :],
                                       preferred_element_type=jnp.float32)
        return stk_ref[...]

    h1 = jnp.maximum(aggregate(x0) + b1, 0.0)                         # (n_tot, 32)
    y1 = jnp.dot(h1, w2, preferred_element_type=jnp.float32)
    h2 = jnp.maximum(aggregate(y1) + b2, 0.0)                         # (n_tot, 32)

    # output layer folded into per-node scalar scores, then one pooled matmul
    s2 = jnp.dot(h2, wo, preferred_element_type=jnp.float32)          # (n_tot, 32)
    row = jax.lax.broadcasted_iota(jnp.int32, (n_tot, 1), 0)
    s = jnp.where(row < nl, s2[:, 0:1], s2[:, 1:2])                   # (n_tot, 1)
    # TODO(synk): if num_graphs grows, emit the output lane-dense as (1, B).
    out_ref[...] = jnp.dot(pool_ref[...], s,
                           preferred_element_type=jnp.float32) + bo


# ------------------------------- JAX glue ---------------------------------- #
def _round_up(x, m):
    return (x + m - 1) // m * m


def dense_gcn_adj(edge_index, num_nodes, num_nodes_pad):
    """D^-1/2 (A + I) D^-1/2 (row = target node), zero-padded to num_nodes_pad.

    Matches PyG gcn_norm's add_remaining_self_loops for simple graphs;
    duplicate edges / pre-existing self loops collapse to weight 1 here.
    """
    src, dst = edge_index[0], edge_index[1]
    a = jnp.zeros((num_nodes_pad, num_nodes_pad), jnp.float32).at[dst, src].set(1.0)
    real = (jnp.arange(num_nodes_pad) < num_nodes).astype(jnp.float32)
    a = jnp.maximum(a, jnp.diag(real))           # self loops on real nodes only
    deg = a.sum(axis=1)
    d_inv_sqrt = jnp.where(deg > 0, 1.0 / jnp.sqrt(deg), 0.0)
    return d_inv_sqrt[:, None] * a * d_inv_sqrt[None, :]


def mean_pool_matrix(batch, num_graphs, num_nodes_pad):
    """(B, N_pad) matrix P with P @ H == global_mean_pool(H, batch)."""
    batch_pad = jnp.pad(batch, (0, num_nodes_pad - batch.shape[0]),
                        constant_values=-1)
    onehot = (batch_pad[None, :] == jnp.arange(num_graphs)[:, None]).astype(jnp.float32)
    counts = onehot.sum(axis=1, keepdims=True)
    return onehot / jnp.maximum(counts, 1.0)


def pack_params(params):
    """Pack all small parameters into one (104, 32) f32 buffer (one DMA)."""
    emb, w1, b1, w2, b2, wo, bo = params
    ew1 = jnp.dot(emb, w1)                       # fold embedding into layer-1 W
    buf = jnp.zeros((_PAR_ROWS, HIDDEN_DIM), jnp.float32)
    buf = buf.at[0:NUM_GATE_TYPES, :].set(ew1)
    buf = buf.at[_B1_ROW, :].set(b1.reshape(HIDDEN_DIM))
    buf = buf.at[_W2_ROWS[0]:_W2_ROWS[1], :].set(w2)
    buf = buf.at[_B2_ROW, :].set(b2.reshape(HIDDEN_DIM))
    buf = buf.at[_WO_ROWS[0]:_WO_ROWS[1], 0].set(wo[:HIDDEN_DIM, 0])
    buf = buf.at[_WO_ROWS[0]:_WO_ROWS[1], 1].set(wo[HIDDEN_DIM:, 0])
    buf = buf.at[_BO_ROW, 0].set(bo.reshape(()))
    return buf


def gnn_rewrite_discriminator(params, lhs_x, lhs_edge_index, lhs_batch,
                              rhs_x, rhs_edge_index, rhs_batch, num_graphs):
    n_l, n_r = lhs_x.shape[0], rhs_x.shape[0]
    n_l_pad, n_r_pad = _round_up(n_l, 8), _round_up(n_r, 8)
    n_tot = n_l_pad + n_r_pad

    idx = jnp.concatenate(
        [jnp.pad(lhs_x.astype(jnp.int32), ((0, n_l_pad - n_l), (0, 0))),
         jnp.pad(rhs_x.astype(jnp.int32), ((0, n_r_pad - n_r), (0, 0)))], axis=0)
    adj_l = dense_gcn_adj(lhs_edge_index, n_l, n_l_pad)
    adj_r = dense_gcn_adj(rhs_edge_index, n_r, n_r_pad)
    pool_cat = jnp.concatenate(
        [mean_pool_matrix(lhs_batch, num_graphs, n_l_pad),
         mean_pool_matrix(rhs_batch, num_graphs, n_r_pad)], axis=1)
    par = pack_params(params)

    vmem = pl.BlockSpec(memory_space=pltpu.MemorySpace.VMEM)
    return pl.pallas_call(
        _gnn_kernel,
        out_shape=jax.ShapeDtypeStruct((num_graphs, 1), jnp.float32),
        in_specs=[vmem] * 5,
        out_specs=vmem,
        scratch_shapes=[pltpu.VMEM((n_tot, HIDDEN_DIM), jnp.float32)],
    )(idx, adj_l, adj_r, pool_cat, par)


# --------------------------- pure-JAX reference ----------------------------- #
def reference(params, lhs_x, lhs_edge_index, lhs_batch,
              rhs_x, rhs_edge_index, rhs_batch, num_graphs):
    emb, w1, b1, w2, b2, wo, bo = params

    def side(x, edge_index, batch):
        n = x.shape[0]
        adj = dense_gcn_adj(edge_index, n, n)
        h = emb[x[:, 0]]
        h = jnp.maximum(adj @ (h @ w1) + b1, 0.0)
        h = jnp.maximum(adj @ (h @ w2) + b2, 0.0)
        return mean_pool_matrix(batch, num_graphs, n) @ h

    combined = jnp.concatenate(
        [side(lhs_x, lhs_edge_index, lhs_batch),
         side(rhs_x, rhs_edge_index, rhs_batch)], axis=1)
    return combined @ wo + bo


# ---------------------------------- main ------------------------------------ #
if __name__ == "__main__":
    # deterministic synthetic inputs: 2 graphs per side, 4 nodes each (N = 8)
    key = jax.random.PRNGKey(0)
    k1, k2 = jax.random.split(key)
    N_L = N_R = 8
    B = 2

    lhs_x = jax.random.randint(k1, (N_L, 1), 0, NUM_GATE_TYPES, dtype=jnp.int32)
    rhs_x = jax.random.randint(k2, (N_R, 1), 0, NUM_GATE_TYPES, dtype=jnp.int32)

    lhs_edge_index = jnp.array([[0, 1, 2, 3, 4, 5, 6, 7],
                                [1, 2, 3, 0, 5, 6, 7, 4]], dtype=jnp.int32)
    rhs_edge_index = jnp.array([[0, 0, 1, 2, 4, 4, 5, 6],
                                [1, 2, 3, 3, 5, 6, 7, 7]], dtype=jnp.int32)
    lhs_batch = jnp.array([0, 0, 0, 0, 1, 1, 1, 1], dtype=jnp.int32)
    rhs_batch = jnp.array([0, 0, 0, 0, 1, 1, 1, 1], dtype=jnp.int32)

    # deterministic parameter init (shapes from the PyTorch __init__)
    pk = jax.random.split(jax.random.PRNGKey(42), 7)
    emb = jax.random.normal(pk[0], (NUM_GATE_TYPES, EMBED_DIM), jnp.float32)
    w1 = jax.random.normal(pk[1], (EMBED_DIM, HIDDEN_DIM), jnp.float32) / jnp.sqrt(EMBED_DIM)
    b1 = 0.1 * jax.random.normal(pk[2], (1, HIDDEN_DIM), jnp.float32)
    w2 = jax.random.normal(pk[3], (HIDDEN_DIM, HIDDEN_DIM), jnp.float32) / jnp.sqrt(HIDDEN_DIM)
    b2 = 0.1 * jax.random.normal(pk[4], (1, HIDDEN_DIM), jnp.float32)
    wo = jax.random.normal(pk[5], (2 * HIDDEN_DIM, 1), jnp.float32) / jnp.sqrt(2 * HIDDEN_DIM)
    bo = 0.1 * jax.random.normal(pk[6], (1, 1), jnp.float32)
    params = (emb, w1, b1, w2, b2, wo, bo)

    out = gnn_rewrite_discriminator(params, lhs_x, lhs_edge_index, lhs_batch,
                                    rhs_x, rhs_edge_index, rhs_batch, B)
    out = jax.block_until_ready(out)

    ref = reference(params, lhs_x, lhs_edge_index, lhs_batch,
                    rhs_x, rhs_edge_index, rhs_batch, B)
    assert out.shape == (B, 1)
    assert jnp.allclose(out, ref, atol=1e-5, rtol=1e-5)

    print("KERNEL_OK")
</pallas_src>

<mosaic_0001>
module attributes {stable_mosaic.version = 11 : i64} {
  func.func @_gnn_kernel(%arg0: memref<16x1xi32, #tpu.memory_space<vmem>>, %arg1: memref<8x8xf32, #tpu.memory_space<vmem>>, %arg2: memref<8x8xf32, #tpu.memory_space<vmem>>, %arg3: memref<2x16xf32, #tpu.memory_space<vmem>>, %arg4: memref<104x32xf32, #tpu.memory_space<vmem>>, %arg5: memref<2x1xf32, #tpu.memory_space<vmem>>, %arg6: memref<16x32xf32, #tpu.memory_space<vmem>>) attributes {dimension_semantics = [], scalar_prefetch = 0 : i64, scratch_operands = 1 : i64, tpu.core_type = #tpu.core_type<tc>} {
    %c0 = arith.constant 0 : index
    %c0_0 = arith.constant 0 : index
    %0 = vector.load %arg4[%c0, %c0_0] : memref<104x32xf32, #tpu.memory_space<vmem>>, vector<16x32xf32>
    %c16 = arith.constant 16 : index
    %c0_1 = arith.constant 0 : index
    %1 = vector.load %arg4[%c16, %c0_1] : memref<104x32xf32, #tpu.memory_space<vmem>>, vector<1x32xf32>
    %c24 = arith.constant 24 : index
    %c0_2 = arith.constant 0 : index
    %2 = vector.load %arg4[%c24, %c0_2] : memref<104x32xf32, #tpu.memory_space<vmem>>, vector<32x32xf32>
    %c56 = arith.constant 56 : index
    %c0_3 = arith.constant 0 : index
    %3 = vector.load %arg4[%c56, %c0_3] : memref<104x32xf32, #tpu.memory_space<vmem>>, vector<1x32xf32>
    %c64 = arith.constant 64 : index
    %c0_4 = arith.constant 0 : index
    %4 = vector.load %arg4[%c64, %c0_4] : memref<104x32xf32, #tpu.memory_space<vmem>>, vector<32x32xf32>
    %c96 = arith.constant 96 : index
    %c0_5 = arith.constant 0 : index
    %5 = vector.load %arg4[%c96, %c0_5] : memref<104x32xf32, #tpu.memory_space<vmem>>, vector<1x1xf32>
    %6 = tpu.iota {dimensions = array<i32: 1>} : vector<16x16xi32>
    %c0_6 = arith.constant 0 : index
    %c0_7 = arith.constant 0 : index
    %7 = vector.load %arg0[%c0_6, %c0_7] : memref<16x1xi32, #tpu.memory_space<vmem>>, vector<16x1xi32>
    %8 = vector.broadcast %7 : vector<16x1xi32> to vector<16x16xi32>
    %9 = arith.cmpi eq, %8, %6 : vector<16x16xi32>
    %10 = arith.extui %9 : vector<16x16xi1> to vector<16x16xi32>
    %11 = arith.sitofp %10 : vector<16x16xi32> to vector<16x16xf32>
    %cst = arith.constant dense<0.000000e+00> : vector<16x32xf32>
    %12 = tpu.matmul %11, %0, %cst {dimension_numbers = #tpu.dot_dimension_numbers<[1], [0], [0], [1], [0, 0, 1, 1], [], []>} : vector<16x16xf32>, vector<16x32xf32>, vector<16x32xf32> -> vector<16x32xf32>
    %c0_8 = arith.constant 0 : index
    %c0_9 = arith.constant 0 : index
    %13 = vector.load %arg1[%c0_8, %c0_9] : memref<8x8xf32, #tpu.memory_space<vmem>>, vector<8x8xf32>
    %14 = vector.extract_strided_slice %12 {offsets = [0, 0], sizes = [8, 32], strides = [1, 1]} : vector<16x32xf32> to vector<8x32xf32>
    %cst_10 = arith.constant dense<0.000000e+00> : vector<8x32xf32>
    %15 = tpu.matmul %13, %14, %cst_10 {dimension_numbers = #tpu.dot_dimension_numbers<[1], [0], [0], [1], [0, 0, 1, 1], [], []>} : vector<8x8xf32>, vector<8x32xf32>, vector<8x32xf32> -> vector<8x32xf32>
    %c0_11 = arith.constant 0 : index
    %c0_12 = arith.constant 0 : index
    %16 = vector.load %arg6[%c0_11, %c0_12] : memref<16x32xf32, #tpu.memory_space<vmem>>, vector<8x32xf32>
    tpu.vector_store %arg6[%c0_11, %c0_12], %15 {strides = array<i32>} : memref<16x32xf32, #tpu.memory_space<vmem>>, vector<8x32xf32>,
    %c0_13 = arith.constant 0 : index
    %c0_14 = arith.constant 0 : index
    %17 = vector.load %arg2[%c0_13, %c0_14] : memref<8x8xf32, #tpu.memory_space<vmem>>, vector<8x8xf32>
    %18 = vector.extract_strided_slice %12 {offsets = [8, 0], sizes = [8, 32], strides = [1, 1]} : vector<16x32xf32> to vector<8x32xf32>
    %cst_15 = arith.constant dense<0.000000e+00> : vector<8x32xf32>
    %19 = tpu.matmul %17, %18, %cst_15 {dimension_numbers = #tpu.dot_dimension_numbers<[1], [0], [0], [1], [0, 0, 1, 1], [], []>} : vector<8x8xf32>, vector<8x32xf32>, vector<8x32xf32> -> vector<8x32xf32>
    %c8 = arith.constant 8 : index
    %c0_16 = arith.constant 0 : index
    %20 = vector.load %arg6[%c8, %c0_16] : memref<16x32xf32, #tpu.memory_space<vmem>>, vector<8x32xf32>
    tpu.vector_store %arg6[%c8, %c0_16], %19 {strides = array<i32>} : memref<16x32xf32, #tpu.memory_space<vmem>>, vector<8x32xf32>,
    %c0_17 = arith.constant 0 : index
    %c0_18 = arith.constant 0 : index
    %21 = vector.load %arg6[%c0_17, %c0_18] : memref<16x32xf32, #tpu.memory_space<vmem>>, vector<16x32xf32>
    %22 = vector.broadcast %1 : vector<1x32xf32> to vector<16x32xf32>
    %23 = arith.addf %21, %22 : vector<16x32xf32>
    %cst_19 = arith.constant 0.000000e+00 : f32
    %24 = vector.broadcast %cst_19 : f32 to vector<16x32xf32>
    %25 = arith.maximumf %23, %24 : vector<16x32xf32>
    %cst_20 = arith.constant dense<0.000000e+00> : vector<16x32xf32>
    %26 = tpu.matmul %25, %2, %cst_20 {dimension_numbers = #tpu.dot_dimension_numbers<[1], [0], [0], [1], [0, 0, 1, 1], [], []>} : vector<16x32xf32>, vector<32x32xf32>, vector<16x32xf32> -> vector<16x32xf32>
    %c0_21 = arith.constant 0 : index
    %c0_22 = arith.constant 0 : index
    %27 = vector.load %arg1[%c0_21, %c0_22] : memref<8x8xf32, #tpu.memory_space<vmem>>, vector<8x8xf32>
    %28 = vector.extract_strided_slice %26 {offsets = [0, 0], sizes = [8, 32], strides = [1, 1]} : vector<16x32xf32> to vector<8x32xf32>
    %cst_23 = arith.constant dense<0.000000e+00> : vector<8x32xf32>
    %29 = tpu.matmul %27, %28, %cst_23 {dimension_numbers = #tpu.dot_dimension_numbers<[1], [0], [0], [1], [0, 0, 1, 1], [], []>} : vector<8x8xf32>, vector<8x32xf32>, vector<8x32xf32> -> vector<8x32xf32>
    %c0_24 = arith.constant 0 : index
    %c0_25 = arith.constant 0 : index
    %30 = vector.load %arg6[%c0_24, %c0_25] : memref<16x32xf32, #tpu.memory_space<vmem>>, vector<8x32xf32>
    tpu.vector_store %arg6[%c0_24, %c0_25], %29 {strides = array<i32>} : memref<16x32xf32, #tpu.memory_space<vmem>>, vector<8x32xf32>,
    %c0_26 = arith.constant 0 : index
    %c0_27 = arith.constant 0 : index
    %31 = vector.load %arg2[%c0_26, %c0_27] : memref<8x8xf32, #tpu.memory_space<vmem>>, vector<8x8xf32>
    %32 = vector.extract_strided_slice %26 {offsets = [8, 0], sizes = [8, 32], strides = [1, 1]} : vector<16x32xf32> to vector<8x32xf32>
    %cst_28 = arith.constant dense<0.000000e+00> : vector<8x32xf32>
    %33 = tpu.matmul %31, %32, %cst_28 {dimension_numbers = #tpu.dot_dimension_numbers<[1], [0], [0], [1], [0, 0, 1, 1], [], []>} : vector<8x8xf32>, vector<8x32xf32>, vector<8x32xf32> -> vector<8x32xf32>
    %c8_29 = arith.constant 8 : index
    %c0_30 = arith.constant 0 : index
    %34 = vector.load %arg6[%c8_29, %c0_30] : memref<16x32xf32, #tpu.memory_space<vmem>>, vector<8x32xf32>
    tpu.vector_store %arg6[%c8_29, %c0_30], %33 {strides = array<i32>} : memref<16x32xf32, #tpu.memory_space<vmem>>, vector<8x32xf32>,
    %c0_31 = arith.constant 0 : index
    %c0_32 = arith.constant 0 : index
    %35 = vector.load %arg6[%c0_31, %c0_32] : memref<16x32xf32, #tpu.memory_space<vmem>>, vector<16x32xf32>
    %36 = vector.broadcast %3 : vector<1x32xf32> to vector<16x32xf32>
    %37 = arith.addf %35, %36 : vector<16x32xf32>
    %cst_33 = arith.constant 0.000000e+00 : f32
    %38 = vector.broadcast %cst_33 : f32 to vector<16x32xf32>
    %39 = arith.maximumf %37, %38 : vector<16x32xf32>
    %cst_34 = arith.constant dense<0.000000e+00> : vector<16x32xf32>
    %40 = tpu.matmul %39, %4, %cst_34 {dimension_numbers = #tpu.dot_dimension_numbers<[1], [0], [0], [1], [0, 0, 1, 1], [], []>} : vector<16x32xf32>, vector<32x32xf32>, vector<16x32xf32> -> vector<16x32xf32>
    %41 = tpu.iota {dimensions = array<i32: 0>} : vector<16x1xi32>
    %c8_i32 = arith.constant 8 : i32
    %42 = vector.broadcast %c8_i32 : i32 to vector<16x1xi32>
    %43 = arith.cmpi slt, %41, %42 : vector<16x1xi32>
    %44 = vector.extract_strided_slice %40 {offsets = [0, 0], sizes = [16, 1], strides = [1, 1]} : vector<16x32xf32> to vector<16x1xf32>
    %45 = vector.extract_strided_slice %40 {offsets = [0, 1], sizes = [16, 1], strides = [1, 1]} : vector<16x32xf32> to vector<16x1xf32>
    %46 = arith.select %43, %44, %45 : vector<16x1xi1>, vector<16x1xf32>
    %c0_35 = arith.constant 0 : index
    %c0_36 = arith.constant 0 : index
    %47 = vector.load %arg3[%c0_35, %c0_36] : memref<2x16xf32, #tpu.memory_space<vmem>>, vector<2x16xf32>
    %cst_37 = arith.constant dense<0.000000e+00> : vector<2x1xf32>
    %48 = tpu.matmul %47, %46, %cst_37 {dimension_numbers = #tpu.dot_dimension_numbers<[1], [0], [0], [1], [0, 0, 1, 1], [], []>} : vector<2x16xf32>, vector<16x1xf32>, vector<2x1xf32> -> vector<2x1xf32>
    %49 = vector.broadcast %5 : vector<1x1xf32> to vector<2x1xf32>
    %50 = arith.addf %48, %49 : vector<2x1xf32>
    %c0_38 = arith.constant 0 : index
    %c0_39 = arith.constant 0 : index
    %51 = vector.load %arg5[%c0_38, %c0_39] : memref<2x1xf32, #tpu.memory_space<vmem>>, vector<2x1xf32>
    tpu.vector_store %arg5[%c0_38, %c0_39], %50 {strides = array<i32>} : memref<2x1xf32, #tpu.memory_space<vmem>>, vector<2x1xf32>,
    return
  }
}

</mosaic_0001>

<llo_original>
// kernel: tpu_custom_call.1
$region0: #{tpu_custom_call.1}
  #allocation0 [shape = 'u32[]', space=smem, size = 0x4, offset = 0x4, fixed_abs, tag = 'smem constant byte address 0x4 - core index']
  #allocation1 [shape = 'u32[72,128]{1,0:T(1,128)}', space=vmem, size = 0x9000, scoped, tag = 'internal scratch']
  #allocation2 [shape = 'f32[16,32]{1,0:T(8,128)}', space=vmem, size = 0x2000, scoped, tag = 'scratch operand']
  %s0 = inlined_call_operand.vmem [shape: s32[16,1], index: 0, kind: input, shape index: {}]
  %s1 = inlined_call_operand.vmem [shape: f32[8,8], index: 1, kind: input, shape index: {}]
  %s2 = inlined_call_operand.vmem [shape: f32[8,8], index: 2, kind: input, shape index: {}]
  %s3 = inlined_call_operand.vmem [shape: f32[2,16], index: 3, kind: input, shape index: {}]
  %s4 = inlined_call_operand.vmem [shape: f32[104,32], index: 4, kind: input, shape index: {}]
  %s5 = inlined_call_operand.vmem [shape: f32[2,1], index: 5, kind: output, shape index: {}]
  %s6 = sld [smem:[#allocation0]]
  $region30: #{tpu_custom_call.1} parent=0
    _
  %s8 = ssub.s32 1, %s6
  %s9 = scalar_select 0, %s8, %s6
  // Predicated region
  $region2: #{tpu_custom_call.1} parent=0 // pred_check
    _
  $region3: #{tpu_custom_call.1} parent=0 // pred_check_branch
    %11 = sbr.rel (0) target = $region5
  $region4: #{tpu_custom_call.1} parent=0 // pred_region
    _
  $region5: #{tpu_custom_call.1} parent=0 // pred_fallthru
    _
  // Predicated region
  $region6: #{tpu_custom_call.1} parent=0 // pred_check
    _
  $region7: #{tpu_custom_call.1} parent=0 // pred_check_branch
    %13 = sbr.rel (0) target = $region9
  $region8: #{tpu_custom_call.1} parent=0 // pred_region
    _
  $region9: #{tpu_custom_call.1} parent=0 // pred_fallthru
    _
  // Predicated region
  $region10: #{tpu_custom_call.1} parent=0 // pred_check
    _
  $region11: #{tpu_custom_call.1} parent=0 // pred_check_branch
    %15 = sbr.rel (0) target = $region13
  $region12: #{tpu_custom_call.1} parent=0 // pred_region
    _
  $region13: #{tpu_custom_call.1} parent=0 // pred_fallthru
    _
  // Predicated region
  $region14: #{tpu_custom_call.1} parent=0 // pred_check
    _
  $region15: #{tpu_custom_call.1} parent=0 // pred_check_branch
    %17 = sbr.rel (0) target = $region17
  $region16: #{tpu_custom_call.1} parent=0 // pred_region
    _
  $region17: #{tpu_custom_call.1} parent=0 // pred_fallthru
    _
  // Predicated region
  $region18: #{tpu_custom_call.1} parent=0 // pred_check
    _
  $region19: #{tpu_custom_call.1} parent=0 // pred_check_branch
    %19 = sbr.rel (0) target = $region21
  $region20: #{tpu_custom_call.1} parent=0 // pred_region
    _
  $region21: #{tpu_custom_call.1} parent=0 // pred_fallthru
    _
  %v20 = vld [vmem:[%s4] sm:$0xff]
  %v21 = vld [vmem:[%s4 + $0x8] sm:$0xff]
  %v22 = vld [vmem:[%s4 + $0x10] sm:$0x1]
  %v23 = vld [vmem:[%s4 + $0x18] sm:$0xff]
  %v24 = vld [vmem:[%s4 + $0x20] sm:$0xff]
  %v25 = vld [vmem:[%s4 + $0x28] sm:$0xff]
  %v26 = vld [vmem:[%s4 + $0x30] sm:$0xff]
  %v27 = vld [vmem:[%s4 + $0x38] sm:$0x1]
  %v28 = vld [vmem:[%s4 + $0x40] sm:$0xff]
  %v29 = vld [vmem:[%s4 + $0x48] sm:$0xff]
  %v30 = vld [vmem:[%s4 + $0x50] sm:$0xff]
  %v31 = vld [vmem:[%s4 + $0x58] sm:$0xff]
  %v32 = vld [vmem:[%s4 + $0x60] sm:$0x1]
  %v33 = vlaneseq
  %v34 = vand.u32 %v33, 127
  %v35 = vld [vmem:[%s0] sm:$0xff]
  %v36 = vld [vmem:[%s0 + $0x8] sm:$0xff]
  %37 = vset.pattern.permute.xlu0 0
  %38 = vperm.xlu0 %37, %v35
  %v39 = vpop.permute.xlu0 %38
  %40 = vset.pattern.permute.xlu0 0
  %41 = vperm.xlu0 %40, %v36
  %v42 = vpop.permute.xlu0 %41
  %vm43 = vcmp.eq.s32.totalorder %v39, %v34
  %vm44 = vcmp.eq.s32.totalorder %v42, %v34
  %v45 = vsel %vm43, 1, 0
  %v46 = vsel %vm44, 1, 0
  %v47 = vcvt.s32.f32 %v45
  %v48 = vcvt.s32.f32 %v46
  %vm49 = vcmask 130048
  %v51 = vsel %vm49, %v47, 0
  %v54 = vsel %vm49, %v48, 0
  %56 = vmatpush.msra.mxu0 0.0
  %57 = vmatpush.msra.mxu0 0.0
  %58 = vmatpush.msra.mxu0 0.0
  %59 = vmatpush.msra.mxu0 0.0
  %60 = vmatpush.msra.mxu0 0.0
  %61 = vmatpush.msra.mxu0 0.0
  %62 = vmatpush.msra.mxu0 0.0
  %63 = vmatpush.msra.mxu0 0.0
  %64 = vmatpush.msra.mxu0 0.0
  %65 = vmatpush.msra.mxu0 0.0
  %66 = vmatpush.msra.mxu0 0.0
  %67 = vmatpush.msra.mxu0 0.0
  %68 = vmatpush.msra.mxu0 0.0
  %69 = vmatpush.msra.mxu0 0.0
  %70 = vmatpush.msra.mxu0 %v21
  %71 = vmatpush.msra.mxu0 %v20
  %72 = vmatmul.f32.gmra.mxu0 %v51
  %v73 = vpop.f32.mrf.mxu0
  %v74 = vadd.f32 0.0, %v73
  %75 = vmatmul.f32.gmra.mxu0 %v54
  %v76 = vpop.f32.mrf.mxu0
  %v77 = vadd.f32 0.0, %v76
  %78 = vdwg.mxu0
  %v79 = vld [vmem:[%s1] sm:$0xff]
  %vm80 = vcmask 64512
  %v82 = vsel %vm80, %v79, 0
  %84 = vmatpush.msra.mxu0 0.0
  %85 = vmatpush.msra.mxu0 0.0
  %86 = vmatpush.msra.mxu0 0.0
  %87 = vmatpush.msra.mxu0 0.0
  %88 = vmatpush.msra.mxu0 0.0
  %89 = vmatpush.msra.mxu0 0.0
  %90 = vmatpush.msra.mxu0 0.0
  %91 = vmatpush.msra.mxu0 0.0
  %92 = vmatpush.msra.mxu0 0.0
  %93 = vmatpush.msra.mxu0 0.0
  %94 = vmatpush.msra.mxu0 0.0
  %95 = vmatpush.msra.mxu0 0.0
  %96 = vmatpush.msra.mxu0 0.0
  %97 = vmatpush.msra.mxu0 0.0
  %98 = vmatpush.msra.mxu0 0.0
  %99 = vmatpush.msra.mxu0 %v74
  %100 = vmatmul.f32.gmra.mxu0 %v82
  %v101 = vpop.f32.mrf.mxu0
  %v102 = vadd.f32 0.0, %v101
  %103 = vdwg.mxu0
  %vm104 = vcmask 261120
  %105 = vst.msk [vmem:[#allocation2] sm:$0xff] %vm104, %v102
  %v106 = vld [vmem:[%s2] sm:$0xff]
  %v108 = vsel %vm80, %v106, 0
  %110 = vmatpush.msra.mxu0 0.0
  %111 = vmatpush.msra.mxu0 0.0
  %112 = vmatpush.msra.mxu0 0.0
  %113 = vmatpush.msra.mxu0 0.0
  %114 = vmatpush.msra.mxu0 0.0
  %115 = vmatpush.msra.mxu0 0.0
  %116 = vmatpush.msra.mxu0 0.0
  %117 = vmatpush.msra.mxu0 0.0
  %118 = vmatpush.msra.mxu0 0.0
  %119 = vmatpush.msra.mxu0 0.0
  %120 = vmatpush.msra.mxu0 0.0
  %121 = vmatpush.msra.mxu0 0.0
  %122 = vmatpush.msra.mxu0 0.0
  %123 = vmatpush.msra.mxu0 0.0
  %124 = vmatpush.msra.mxu0 0.0
  %125 = vmatpush.msra.mxu0 %v77
  %126 = vmatmul.f32.gmra.mxu0 %v108
  %v127 = vpop.f32.mrf.mxu0
  %v128 = vadd.f32 0.0, %v127
  %129 = vdwg.mxu0
  %130 = vst.msk [vmem:[#allocation2 + $0x8] sm:$0xff] %vm104, %v128
  %v131 = vld [vmem:[#allocation2] sm:$0xff]
  %v132 = vld [vmem:[#allocation2 + $0x8] sm:$0xff]
  %v133 = vperm.slane %v22, 0
  %v134 = vadd.f32 %v131, %v133
  %v135 = vadd.f32 %v132, %v133
  %v136 = vmax.f32 %v134, 0.0
  %v137 = vmax.f32 %v135, 0.0
  %v139 = vsel %vm104, %v136, 0
  %v142 = vsel %vm104, %v137, 0
  %144 = vmatpush.msra.mxu0 0.0
  %145 = vmatpush.msra.mxu0 0.0
  %146 = vmatpush.msra.mxu0 0.0
  %147 = vmatpush.msra.mxu0 0.0
  %148 = vmatpush.msra.mxu0 0.0
  %149 = vmatpush.msra.mxu0 0.0
  %150 = vmatpush.msra.mxu0 0.0
  %151 = vmatpush.msra.mxu0 0.0
  %152 = vmatpush.msra.mxu0 0.0
  %153 = vmatpush.msra.mxu0 0.0
  %154 = vmatpush.msra.mxu0 0.0
  %155 = vmatpush.msra.mxu0 0.0
  %156 = vmatpush.msra.mxu0 %v26
  %157 = vmatpush.msra.mxu0 %v25
  %158 = vmatpush.msra.mxu0 %v24
  %159 = vmatpush.msra.mxu0 %v23
  %160 = vmatmul.f32.gmra.mxu0 %v139
  %v161 = vpop.f32.mrf.mxu0
  %v162 = vadd.f32 0.0, %v161
  %163 = vmatmul.f32.gmra.mxu0 %v142
  %v164 = vpop.f32.mrf.mxu0
  %v165 = vadd.f32 0.0, %v164
  %166 = vdwg.mxu0
  %v167 = vld [vmem:[%s1] sm:$0xff]
  %v169 = vsel %vm80, %v167, 0
  %171 = vmatpush.msra.mxu0 0.0
  %172 = vmatpush.msra.mxu0 0.0
  %173 = vmatpush.msra.mxu0 0.0
  %174 = vmatpush.msra.mxu0 0.0
  %175 = vmatpush.msra.mxu0 0.0
  %176 = vmatpush.msra.mxu0 0.0
  %177 = vmatpush.msra.mxu0 0.0
  %178 = vmatpush.msra.mxu0 0.0
  %179 = vmatpush.msra.mxu0 0.0
  %180 = vmatpush.msra.mxu0 0.0
  %181 = vmatpush.msra.mxu0 0.0
  %182 = vmatpush.msra.mxu0 0.0
  %183 = vmatpush.msra.mxu0 0.0
  %184 = vmatpush.msra.mxu0 0.0
  %185 = vmatpush.msra.mxu0 0.0
  %186 = vmatpush.msra.mxu0 %v162
  %187 = vmatmul.f32.gmra.mxu0 %v169
  %v188 = vpop.f32.mrf.mxu0
  %v189 = vadd.f32 0.0, %v188
  %190 = vdwg.mxu0
  %191 = vst.msk [vmem:[#allocation2] sm:$0xff] %vm104, %v189
  %v192 = vld [vmem:[%s2] sm:$0xff]
  %v194 = vsel %vm80, %v192, 0
  %196 = vmatpush.msra.mxu0 0.0
  %197 = vmatpush.msra.mxu0 0.0
  %198 = vmatpush.msra.mxu0 0.0
  %199 = vmatpush.msra.mxu0 0.0
  %200 = vmatpush.msra.mxu0 0.0
  %201 = vmatpush.msra.mxu0 0.0
  %202 = vmatpush.msra.mxu0 0.0
  %203 = vmatpush.msra.mxu0 0.0
  %204 = vmatpush.msra.mxu0 0.0
  %205 = vmatpush.msra.mxu0 0.0
  %206 = vmatpush.msra.mxu0 0.0
  %207 = vmatpush.msra.mxu0 0.0
  %208 = vmatpush.msra.mxu0 0.0
  %209 = vmatpush.msra.mxu0 0.0
  %210 = vmatpush.msra.mxu0 0.0
  %211 = vmatpush.msra.mxu0 %v165
  %212 = vmatmul.f32.gmra.mxu0 %v194
  %v213 = vpop.f32.mrf.mxu0
  %v214 = vadd.f32 0.0, %v213
  %215 = vdwg.mxu0
  %216 = vst.msk [vmem:[#allocation2 + $0x8] sm:$0xff] %vm104, %v214
  %v217 = vld [vmem:[#allocation2] sm:$0xff]
  %v218 = vld [vmem:[#allocation2 + $0x8] sm:$0xff]
  %v219 = vperm.slane %v27, 0
  %v220 = vadd.f32 %v217, %v219
  %v221 = vadd.f32 %v218, %v219
  %v222 = vmax.f32 %v220, 0.0
  %v223 = vmax.f32 %v221, 0.0
  %v225 = vsel %vm104, %v222, 0
  %v228 = vsel %vm104, %v223, 0
  %230 = vmatpush.msra.mxu0 0.0
  %231 = vmatpush.msra.mxu0 0.0
  %232 = vmatpush.msra.mxu0 0.0
  %233 = vmatpush.msra.mxu0 0.0
  %234 = vmatpush.msra.mxu0 0.0
  %235 = vmatpush.msra.mxu0 0.0
  %236 = vmatpush.msra.mxu0 0.0
  %237 = vmatpush.msra.mxu0 0.0
  %238 = vmatpush.msra.mxu0 0.0
  %239 = vmatpush.msra.mxu0 0.0
  %240 = vmatpush.msra.mxu0 0.0
  %241 = vmatpush.msra.mxu0 0.0
  %242 = vmatpush.msra.mxu0 %v31
  %243 = vmatpush.msra.mxu0 %v30
  %244 = vmatpush.msra.mxu0 %v29
  %245 = vmatpush.msra.mxu0 %v28
  %246 = vmatmul.f32.gmra.mxu0 %v225
  %v247 = vpop.f32.mrf.mxu0
  %v248 = vadd.f32 0.0, %v247
  %249 = vmatmul.f32.gmra.mxu0 %v228
  %v250 = vpop.f32.mrf.mxu0
  %v251 = vadd.f32 0.0, %v250
  %252 = vdwg.mxu0
  %v253 = vlaneseq
  %v254 = vshrl.u32 %v253, 7
  %v255 = vadd.s32 %v254, 8
  %vm256 = vcmp.lt.s32.totalorder %v254, 8
  %vm257 = vcmp.lt.s32.totalorder %v255, 8
  %260 = vrot.lane.b32.xlu0 %v248, 127
  %v261 = vpop.permute.xlu0 %260
  %262 = vrot.lane.b32.xlu0 %v251, 127
  %v263 = vpop.permute.xlu0 %262
  %v266 = vsel %vm256, %v248, %v261
  %v267 = vsel %vm257, %v251, %v263
  %v268 = vld [vmem:[%s3] sm:$0x3]
  %v269 = vperm.slane %v32, 0
  %v271 = vsel %vm49, %v268, 0
  %273 = vmatpush.msra.mxu0 0.0
  %274 = vmatpush.msra.mxu0 0.0
  %275 = vmatpush.msra.mxu0 0.0
  %276 = vmatpush.msra.mxu0 0.0
  %277 = vmatpush.msra.mxu0 0.0
  %278 = vmatpush.msra.mxu0 0.0
  %279 = vmatpush.msra.mxu0 0.0
  %280 = vmatpush.msra.mxu0 0.0
  %281 = vmatpush.msra.mxu0 0.0
  %282 = vmatpush.msra.mxu0 0.0
  %283 = vmatpush.msra.mxu0 0.0
  %284 = vmatpush.msra.mxu0 0.0
  %285 = vmatpush.msra.mxu0 0.0
  %286 = vmatpush.msra.mxu0 0.0
  %287 = vmatpush.msra.mxu0 %v267
  %288 = vmatpush.msra.mxu0 %v266
  %289 = vmatmul.f32.gmra.mxu0 %v271
  %v290 = vpop.f32.mrf.mxu0
  %v291 = vadd.f32 %v269, %v290
  %292 = vdwg.mxu0
  %vm293 = vcmask 1024
  %294 = vst.msk [vmem:[%s5] sm:$0x3] %vm293, %v291
  // Predicated region
  $region22: #{tpu_custom_call.1} parent=0 // pred_check
    _
  $region23: #{tpu_custom_call.1} parent=0 // pred_check_branch
    %296 = sbr.rel (0) target = $region25
  $region24: #{tpu_custom_call.1} parent=0 // pred_region
    _
  $region25: #{tpu_custom_call.1} parent=0 // pred_fallthru
    _
  // Predicated region
  $region26: #{tpu_custom_call.1} parent=0 // pred_check
    _
  $region27: #{tpu_custom_call.1} parent=0 // pred_check_branch
    %298 = sbr.rel (0) target = $region29
  $region28: #{tpu_custom_call.1} parent=0 // pred_region
    _
  $region29: #{tpu_custom_call.1} parent=0 // pred_fallthru
    _

</llo_original>
